<compile_context>
chip_gen: v7x
topology: tpu7x:2x2x1
jax: 0.10.0
libtpu: 0.0.40
codegen_flags: <defaults>
</compile_context>

<pallas_src>
import functools

import jax
import jax.numpy as jnp
from jax.experimental import pallas as pl
from jax.experimental.pallas import tpu as pltpu


def _round_up(x, m):
    return ((x + m - 1) // m) * m


def _self_output_kernel(x_ref, w_ref, res_ref, params_ref, o_ref, acc_ref, *,
                        d_out_true, eps):
    k = pl.program_id(1)

    @pl.when(k == 0)
    def _init():
        acc_ref[...] = jnp.zeros_like(acc_ref)

    # dense: partial x @ W over this K slice (MXU, f32 accumulate)
    acc_ref[...] += jnp.dot(x_ref[...], w_ref[...],
                            preferred_element_type=jnp.float32)

    @pl.when(k == pl.num_programs(1) - 1)
    def _finalize():
        bias = params_ref[0:1, :]    # (1, D_out_p) f32
        gamma = params_ref[1:2, :]
        beta = params_ref[2:3, :]
        # dropout: identity (eval mode)
        r = acc_ref[...] + bias + res_ref[...].astype(jnp.float32)
        # LayerNorm over the true (unpadded) feature dim.  Padded lanes of r are exactly
        # zero (zero-padded weight cols / bias / residual), so one fused pass of
        # sum and sum-of-squares yields the correct moments when divided by d_out_true.
        inv_d = jnp.float32(1.0 / d_out_true)
        s1 = jnp.sum(r, axis=-1, keepdims=True)
        s2 = jnp.sum(r * r, axis=-1, keepdims=True)
        mean = s1 * inv_d
        var = jnp.maximum(s2 * inv_d - mean * mean, 0.0)
        inv = jax.lax.rsqrt(var + eps)
        o_ref[...] = ((r - mean) * inv * gamma + beta).astype(o_ref.dtype)


def self_output(hidden_states, input_tensor, weight, bias, gamma, beta, *,
                tile_m=256, tile_k=512, compute_dtype=None,
                vmem_limit_bytes=64 * 1024 * 1024, eps=1e-5):
    """hidden_states: [B, S, D_in]; input_tensor: [B, S, D_out]; weight: [D_in, D_out]
    (i.e. PyTorch nn.Linear weight transposed); bias/gamma/beta: [D_out]."""
    B, S, D_in = hidden_states.shape
    D_out = weight.shape[1]
    assert weight.shape == (D_in, D_out)
    assert input_tensor.shape == (B, S, D_out)

    out_dtype = hidden_states.dtype
    if compute_dtype is None:
        compute_dtype = out_dtype          # pass jnp.bfloat16 to halve HBM traffic / use bf16 MXU

    N = B * S
    x = hidden_states.reshape(N, D_in).astype(compute_dtype)
    w = weight.astype(compute_dtype)
    res = input_tensor.reshape(N, D_out).astype(compute_dtype)
    params = jnp.stack(
        [bias.astype(jnp.float32), gamma.astype(jnp.float32), beta.astype(jnp.float32)],
        axis=0)                            # (3, D_out)

    # Lane-dense / MXU-friendly padding: features to multiples of 128, rows to multiple of 8.
    D_in_p = _round_up(D_in, 128)
    D_out_p = _round_up(D_out, 128)
    N_p8 = _round_up(N, 8)
    tm = min(_round_up(max(tile_m, 8), 8), N_p8)
    N_p = _round_up(N, tm)

    # K tile: largest of (tile_k, 512, 256, 128) dividing D_in_p (D_in_p is a multiple of 128).
    tk = None
    for cand in (tile_k, 512, 256, 128):
        if cand and cand <= D_in_p and D_in_p % cand == 0:
            tk = cand
            break
    if tk is None:
        tk = D_in_p

    x = jnp.pad(x, ((0, N_p - N), (0, D_in_p - D_in)))
    w = jnp.pad(w, ((0, D_in_p - D_in), (0, D_out_p - D_out)))
    res = jnp.pad(res, ((0, N_p - N), (0, D_out_p - D_out)))
    params = jnp.pad(params, ((0, 0), (0, D_out_p - D_out)))

    num_m = N_p // tm
    num_k = D_in_p // tk

    kernel = functools.partial(_self_output_kernel,
                               d_out_true=float(D_out), eps=float(eps))

    out = pl.pallas_call(
        kernel,
        out_shape=jax.ShapeDtypeStruct((N_p, D_out_p), out_dtype),
        grid_spec=pltpu.PrefetchScalarGridSpec(
            num_scalar_prefetch=0,
            grid=(num_m, num_k),                                   # K innermost (reduction)
            in_specs=[
                pl.BlockSpec((tm, tk), lambda i, k: (i, k)),       # x rows, K slice
                pl.BlockSpec((tk, D_out_p), lambda i, k: (k, 0)),  # weight K slice
                pl.BlockSpec((tm, D_out_p), lambda i, k: (i, 0)),  # residual rows
                pl.BlockSpec((3, D_out_p), lambda i, k: (0, 0)),   # packed bias/gamma/beta
            ],
            out_specs=pl.BlockSpec((tm, D_out_p), lambda i, k: (i, 0)),
            scratch_shapes=[pltpu.VMEM((tm, D_out_p), jnp.float32)],   # f32 accumulator
        ),
        compiler_params=pltpu.CompilerParams(
            dimension_semantics=("parallel", "arbitrary"),
            vmem_limit_bytes=vmem_limit_bytes,
        ),
    )(x, w, res, params)

    return out[:N, :D_out].reshape(B, S, D_out)


def _reference(hidden_states, input_tensor, weight, bias, gamma, beta, eps=1e-5):
    hs = hidden_states.astype(jnp.float32)
    it = input_tensor.astype(jnp.float32)
    w = weight.astype(jnp.float32)
    y = hs @ w + bias.astype(jnp.float32)
    r = y + it
    mu = jnp.mean(r, axis=-1, keepdims=True)
    var = jnp.mean((r - mu) ** 2, axis=-1, keepdims=True)
    return (r - mu) * jax.lax.rsqrt(var + eps) * gamma.astype(jnp.float32) + beta.astype(jnp.float32)


if __name__ == "__main__":
    # --- Test 1: f32, tiny model dims (exercises lane / row padding: D=32 -> 128) ---
    B, S, D_in, D_out = 2, 8, 32, 32
    k1, k2, k3, k4, k5, k6 = jax.random.split(jax.random.PRNGKey(0), 6)

    hidden_states = jax.random.normal(k1, (B, S, D_in), dtype=jnp.float32)
    input_tensor = jax.random.normal(k2, (B, S, D_out), dtype=jnp.float32)
    weight = jax.random.normal(k3, (D_in, D_out), dtype=jnp.float32) * 0.05
    bias = jax.random.normal(k4, (D_out,), dtype=jnp.float32) * 0.01
    gamma = 1.0 + 0.1 * jax.random.normal(k5, (D_out,), dtype=jnp.float32)
    beta = 0.1 * jax.random.normal(k6, (D_out,), dtype=jnp.float32)

    out = self_output(hidden_states, input_tensor, weight, bias, gamma, beta)
    out = jax.block_until_ready(out)
    ref = _reference(hidden_states, input_tensor, weight, bias, gamma, beta)
    assert out.shape == (B, S, D_out)
    assert jnp.allclose(out, ref, atol=1e-3, rtol=1e-3), float(jnp.max(jnp.abs(out - ref)))

    # --- Test 2: bf16 inputs / weight, multi-tile grid with a real K reduction (2 row tiles x 2 K steps) ---
    B2, S2, Din2, Dout2 = 2, 64, 256, 256
    j1, j2, j3, j4, j5, j6 = jax.random.split(jax.random.PRNGKey(1), 6)
    hs2 = jax.random.normal(j1, (B2, S2, Din2), dtype=jnp.float32)
    it2 = jax.random.normal(j2, (B2, S2, Dout2), dtype=jnp.float32)
    w2 = jax.random.normal(j3, (Din2, Dout2), dtype=jnp.float32) * 0.05
    b2 = jax.random.normal(j4, (Dout2,), dtype=jnp.float32) * 0.01
    g2 = 1.0 + 0.1 * jax.random.normal(j5, (Dout2,), dtype=jnp.float32)
    be2 = 0.1 * jax.random.normal(j6, (Dout2,), dtype=jnp.float32)

    hs2_b, it2_b, w2_b = (hs2.astype(jnp.bfloat16), it2.astype(jnp.bfloat16),
                          w2.astype(jnp.bfloat16))
    out2 = self_output(hs2_b, it2_b, w2_b, b2, g2, be2,
                       tile_m=64, tile_k=128, compute_dtype=jnp.bfloat16)
    out2 = jax.block_until_ready(out2)
    ref2 = _reference(hs2_b, it2_b, w2_b, b2, g2, be2)   # same bf16-rounded inputs, f32 math
    assert out2.shape == (B2, S2, Dout2)
    assert jnp.allclose(out2.astype(jnp.float32), ref2, atol=1e-1, rtol=1e-1)

    print("KERNEL_OK")
</pallas_src>

<mosaic_0001>
module attributes {stable_mosaic.version = 11 : i64} {
  func.func @_self_output_kernel(%arg0: i32, %arg1: i32, %arg2: memref<16x128xf32, #tpu.memory_space<vmem>>, %arg3: memref<128x128xf32, #tpu.memory_space<vmem>>, %arg4: memref<16x128xf32, #tpu.memory_space<vmem>>, %arg5: memref<3x128xf32, #tpu.memory_space<vmem>>, %arg6: memref<16x128xf32, #tpu.memory_space<vmem>>, %arg7: memref<16x128xf32, #tpu.memory_space<vmem>>) attributes {dimension_semantics = [#tpu.dimension_semantics<parallel>, #tpu.dimension_semantics<arbitrary>], iteration_bounds = array<i64: 1, 1>, scalar_prefetch = 0 : i64, scratch_operands = 1 : i64, tpu.core_type = #tpu.core_type<tc>, window_params = [{transform_indices = @transform_0, window_bounds = array<i64: 16, 128>}, {transform_indices = @transform_1, window_bounds = array<i64: 128, 128>}, {transform_indices = @transform_2, window_bounds = array<i64: 16, 128>}, {pipeline_mode = #tpu.pipeline_mode<synchronous>, transform_indices = @transform_3, window_bounds = array<i64: 3, 128>}, {transform_indices = @transform_4, window_bounds = array<i64: 16, 128>}]} {
    %c0_i32 = arith.constant 0 : i32
    %0 = arith.cmpi eq, %arg1, %c0_i32 : i32
    %1 = arith.extui %0 : i1 to i32
    %c0_i32_0 = arith.constant 0 : i32
    %2 = arith.cmpi ne, %1, %c0_i32_0 : i32
    scf.if %2 {
      %cst_10 = arith.constant 0.000000e+00 : f32
      %12 = vector.broadcast %cst_10 : f32 to vector<16x128xf32>
      %c0_11 = arith.constant 0 : index
      %c0_12 = arith.constant 0 : index
      %13 = vector.load %arg7[%c0_11, %c0_12] : memref<16x128xf32, #tpu.memory_space<vmem>>, vector<16x128xf32>
      tpu.vector_store %arg7[%c0_11, %c0_12], %12 {strides = array<i32>} : memref<16x128xf32, #tpu.memory_space<vmem>>, vector<16x128xf32>,
    } else {
    }
    %c0 = arith.constant 0 : index
    %c0_1 = arith.constant 0 : index
    %3 = vector.load %arg7[%c0, %c0_1] : memref<16x128xf32, #tpu.memory_space<vmem>>, vector<16x128xf32>
    %c0_2 = arith.constant 0 : index
    %c0_3 = arith.constant 0 : index
    %4 = vector.load %arg2[%c0_2, %c0_3] : memref<16x128xf32, #tpu.memory_space<vmem>>, vector<16x128xf32>
    %c0_4 = arith.constant 0 : index
    %c0_5 = arith.constant 0 : index
    %5 = vector.load %arg3[%c0_4, %c0_5] : memref<128x128xf32, #tpu.memory_space<vmem>>, vector<128x128xf32>
    %cst = arith.constant dense<0.000000e+00> : vector<16x128xf32>
    %6 = tpu.matmul %4, %5, %cst {dimension_numbers = #tpu.dot_dimension_numbers<[1], [0], [0], [1], [0, 0, 1, 1], [], []>} : vector<16x128xf32>, vector<128x128xf32>, vector<16x128xf32> -> vector<16x128xf32>
    %7 = arith.addf %3, %6 : vector<16x128xf32>
    %c0_6 = arith.constant 0 : index
    %c0_7 = arith.constant 0 : index
    %8 = vector.load %arg7[%c0_6, %c0_7] : memref<16x128xf32, #tpu.memory_space<vmem>>, vector<16x128xf32>
    tpu.vector_store %arg7[%c0_6, %c0_7], %7 {strides = array<i32>} : memref<16x128xf32, #tpu.memory_space<vmem>>, vector<16x128xf32>,
    %c0_i32_8 = arith.constant 0 : i32
    %9 = arith.cmpi eq, %arg1, %c0_i32_8 : i32
    %10 = arith.extui %9 : i1 to i32
    %c0_i32_9 = arith.constant 0 : i32
    %11 = arith.cmpi ne, %10, %c0_i32_9 : i32
    scf.if %11 {
      %c0_10 = arith.constant 0 : index
      %c0_11 = arith.constant 0 : index
      %12 = vector.load %arg5[%c0_10, %c0_11] : memref<3x128xf32, #tpu.memory_space<vmem>>, vector<1x128xf32>
      %c1 = arith.constant 1 : index
      %c0_12 = arith.constant 0 : index
      %13 = vector.load %arg5[%c1, %c0_12] : memref<3x128xf32, #tpu.memory_space<vmem>>, vector<1x128xf32>
      %c2 = arith.constant 2 : index
      %c0_13 = arith.constant 0 : index
      %14 = vector.load %arg5[%c2, %c0_13] : memref<3x128xf32, #tpu.memory_space<vmem>>, vector<1x128xf32>
      %c0_14 = arith.constant 0 : index
      %c0_15 = arith.constant 0 : index
      %15 = vector.load %arg7[%c0_14, %c0_15] : memref<16x128xf32, #tpu.memory_space<vmem>>, vector<16x128xf32>
      %16 = vector.broadcast %12 : vector<1x128xf32> to vector<16x128xf32>
      %17 = arith.addf %15, %16 : vector<16x128xf32>
      %c0_16 = arith.constant 0 : index
      %c0_17 = arith.constant 0 : index
      %18 = vector.load %arg4[%c0_16, %c0_17] : memref<16x128xf32, #tpu.memory_space<vmem>>, vector<16x128xf32>
      %19 = arith.addf %17, %18 : vector<16x128xf32>
      %cst_18 = arith.constant dense<0.000000e+00> : vector<16xf32>
      %20 = vector.multi_reduction <add>, %19, %cst_18 [1] : vector<16x128xf32> to vector<16xf32>
      %21 = vector.shape_cast %20 : vector<16xf32> to vector<16x1xf32>
      %22 = arith.mulf %19, %19 : vector<16x128xf32>
      %cst_19 = arith.constant dense<0.000000e+00> : vector<16xf32>
      %23 = vector.multi_reduction <add>, %22, %cst_19 [1] : vector<16x128xf32> to vector<16xf32>
      %24 = vector.shape_cast %23 : vector<16xf32> to vector<16x1xf32>
      %cst_20 = arith.constant 3.125000e-02 : f32
      %25 = vector.broadcast %cst_20 : f32 to vector<16x1xf32>
      %26 = arith.mulf %21, %25 : vector<16x1xf32>
      %cst_21 = arith.constant 3.125000e-02 : f32
      %27 = vector.broadcast %cst_21 : f32 to vector<16x1xf32>
      %28 = arith.mulf %24, %27 : vector<16x1xf32>
      %29 = arith.mulf %26, %26 : vector<16x1xf32>
      %30 = arith.subf %28, %29 : vector<16x1xf32>
      %cst_22 = arith.constant 0.000000e+00 : f32
      %31 = vector.broadcast %cst_22 : f32 to vector<16x1xf32>
      %32 = arith.maximumf %30, %31 : vector<16x1xf32>
      %cst_23 = arith.constant 9.99999974E-6 : f32
      %33 = vector.broadcast %cst_23 : f32 to vector<16x1xf32>
      %34 = arith.addf %32, %33 : vector<16x1xf32>
      %35 = math.rsqrt %34 : vector<16x1xf32>
      %36 = vector.broadcast %26 : vector<16x1xf32> to vector<16x128xf32>
      %37 = arith.subf %19, %36 : vector<16x128xf32>
      %38 = vector.broadcast %35 : vector<16x1xf32> to vector<16x128xf32>
      %39 = arith.mulf %37, %38 : vector<16x128xf32>
      %40 = vector.broadcast %13 : vector<1x128xf32> to vector<16x128xf32>
      %41 = arith.mulf %39, %40 : vector<16x128xf32>
      %42 = vector.broadcast %14 : vector<1x128xf32> to vector<16x128xf32>
      %43 = arith.addf %41, %42 : vector<16x128xf32>
      %c0_24 = arith.constant 0 : index
      %c0_25 = arith.constant 0 : index
      %44 = vector.load %arg6[%c0_24, %c0_25] : memref<16x128xf32, #tpu.memory_space<vmem>>, vector<16x128xf32>
      tpu.vector_store %arg6[%c0_24, %c0_25], %43 {strides = array<i32>} : memref<16x128xf32, #tpu.memory_space<vmem>>, vector<16x128xf32>,
    } else {
    }
    return
  }
  func.func @transform_0(%arg0: i32, %arg1: i32) -> (i32, i32) {
    %c0_i32 = arith.constant 0 : i32
    return %arg0, %arg1 : i32, i32
  }
  func.func @transform_1(%arg0: i32, %arg1: i32) -> (i32, i32) {
    %c0_i32 = arith.constant 0 : i32
    %c0_i32_0 = arith.constant 0 : i32
    return %arg1, %c0_i32 : i32, i32
  }
  func.func @transform_2(%arg0: i32, %arg1: i32) -> (i32, i32) {
    %c0_i32 = arith.constant 0 : i32
    %c0_i32_0 = arith.constant 0 : i32
    return %arg0, %c0_i32 : i32, i32
  }
  func.func @transform_3(%arg0: i32, %arg1: i32) -> (i32, i32) {
    %c0_i32 = arith.constant 0 : i32
    %c0_i32_0 = arith.constant 0 : i32
    %c0_i32_1 = arith.constant 0 : i32
    return %c0_i32, %c0_i32_0 : i32, i32
  }
  func.func @transform_4(%arg0: i32, %arg1: i32) -> (i32, i32) {
    %c0_i32 = arith.constant 0 : i32
    %c0_i32_0 = arith.constant 0 : i32
    return %arg0, %c0_i32 : i32, i32
  }
}

</mosaic_0001>

<llo_original>
// kernel: tpu_custom_call.1
$region0: #{tpu_custom_call.1}
  #allocation0 [shape = 'u32[]', space=smem, size = 0x4, offset = 0x4, fixed_abs, tag = 'smem constant byte address 0x4 - core index']
  #allocation1 [shape = 'u32[144,128]{1,0:T(1,128)}', space=vmem, size = 0x12000, scoped, tag = 'internal scratch']
  #allocation2 [shape = 'f32[16,128]{1,0:T(8,128)}', space=vmem, size = 0x2000, scoped, tag = 'scratch operand']
  %s0 = inlined_call_operand.hbm [shape: f32[16,128], index: 0, kind: input, shape index: {}]
  %s1 = inlined_call_operand.hbm [shape: f32[128,128], index: 1, kind: input, shape index: {}]
  %s2 = inlined_call_operand.hbm [shape: f32[16,128], index: 2, kind: input, shape index: {}]
  %s3 = inlined_call_operand.hbm [shape: f32[3,128], index: 3, kind: input, shape index: {}]
  %s4 = inlined_call_operand.hbm [shape: f32[16,128], index: 4, kind: output, shape index: {}]
  %s5 = sld [smem:[#allocation0]]
  $region50: #{tpu_custom_call.1} parent=0
    _
  %s7 = ssub.s32 1, %s5
  %s8 = scalar_select 0, %s7, %s5
  $region1: #{tpu_custom_call.1} parent=0
    #allocation3 [shape = 'u8[8192]{0}', space=vmem, size = 0x2000, scoped, tag = 'input window, operand 0, single buffered']
    #allocation4 [shape = 's32[1]{0}', space=sflag, size = 0x4, scoped, tag = 'scoped memory for tpu_custom_call.1']
    #allocation5 [shape = 's32[1]{0}', space=sflag, size = 0x4, scoped, tag = 'scoped memory for tpu_custom_call.1']
    #allocation6 [shape = 'u8[65536]{0}', space=vmem, size = 0x10000, scoped, tag = 'input window, operand 1, single buffered']
    #allocation7 [shape = 's32[1]{0}', space=sflag, size = 0x4, scoped, tag = 'scoped memory for tpu_custom_call.1']
    #allocation8 [shape = 'u8[8192]{0}', space=vmem, size = 0x2000, scoped, tag = 'input window, operand 2, single buffered']
    #allocation9 [shape = 'u8[2048]{0}', space=vmem, size = 0x800, scoped, tag = 'input window, operand 3, single buffered']
    #allocation10 [shape = 's32[1]{0}', space=sflag, size = 0x4, scoped, tag = 'scoped memory for tpu_custom_call.1']
    #allocation11 [shape = 'u8[8192]{0}', space=vmem, size = 0x2000, scoped, tag = 'output window, operand 0, single buffered']
    %9 = vsyncpa [#allocation4], 0
    %10 = vsyncpa [#allocation7], 0
    %11 = vsyncpa [#allocation10], 0
    %12 = vsyncpa [#allocation5], 0
    // Predicated region
    $region2: #{tpu_custom_call.1} parent=1 // pred_check
      _
    $region3: #{tpu_custom_call.1} parent=1 // pred_check_branch
      %14 = sbr.rel (0) target = $region5
    $region4: #{tpu_custom_call.1} parent=1 // pred_region
      %s16 = ssub.s32 256, 256
      %17 = vsyncadd [#allocation4], %s16
      %s18 = sshll.u32 [#allocation3], 4
      %s19 = int_to_ptr.vmem [resolvable:$true] %s18
      %24 = dma.hbm_to_vmem [thread:$0]  %s0, 256, %s19, [#allocation4], 128, 128, 8
    $region5: #{tpu_custom_call.1} parent=1 // pred_fallthru
      _
    // Predicated region
    $region6: #{tpu_custom_call.1} parent=1 // pred_check
      _
    $region7: #{tpu_custom_call.1} parent=1 // pred_check_branch
      %26 = sbr.rel (0) target = $region9
    $region8: #{tpu_custom_call.1} parent=1 // pred_region
      %s28 = ssub.s32 2048, 2048
      %29 = vsyncadd [#allocation7], %s28
      %s30 = sshll.u32 [#allocation6], 4
      %s31 = int_to_ptr.vmem [resolvable:$true] %s30
      %36 = dma.hbm_to_vmem [thread:$0]  %s1, 2048, %s31, [#allocation7], 128, 128, 8
    $region9: #{tpu_custom_call.1} parent=1 // pred_fallthru
      _
    // Predicated region
    $region10: #{tpu_custom_call.1} parent=1 // pred_check
      _
    $region11: #{tpu_custom_call.1} parent=1 // pred_check_branch
      %38 = sbr.rel (0) target = $region13
    $region12: #{tpu_custom_call.1} parent=1 // pred_region
      %s40 = ssub.s32 256, 256
      %41 = vsyncadd [#allocation7], %s40
      %s42 = sshll.u32 [#allocation8], 4
      %s43 = int_to_ptr.vmem [resolvable:$true] %s42
      %48 = dma.hbm_to_vmem [thread:$0]  %s2, 256, %s43, [#allocation7], 128, 128, 8
    $region13: #{tpu_custom_call.1} parent=1 // pred_fallthru
      _
    // Predicated region
    $region14: #{tpu_custom_call.1} parent=1 // pred_check
      _
    $region15: #{tpu_custom_call.1} parent=1 // pred_check_branch
      %50 = sbr.rel (0) target = $region17
    $region16: #{tpu_custom_call.1} parent=1 // pred_region
      %s52 = ssub.s32 64, 64
      %53 = vsyncadd [#allocation10], %s52
      %s55 = sshll.u32 [#allocation9], 4
      %s56 = int_to_ptr.vmem [resolvable:$true] %s55
      %58 = dma.hbm_to_vmem [thread:$0]  %s3, 64, %s56, [#allocation10]
    $region17: #{tpu_custom_call.1} parent=1 // pred_fallthru
      _
    // Predicated region
    $region18: #{tpu_custom_call.1} parent=1 // pred_check
      _
    $region19: #{tpu_custom_call.1} parent=1 // pred_check_branch
      %60 = sbr.rel (0) target = $region21
    $region20: #{tpu_custom_call.1} parent=1 // pred_region
      %61 = dma.done [#allocation4], 256
    $region21: #{tpu_custom_call.1} parent=1 // pred_fallthru
      _
    // Predicated region
    $region22: #{tpu_custom_call.1} parent=1 // pred_check
      _
    $region23: #{tpu_custom_call.1} parent=1 // pred_check_branch
      %63 = sbr.rel (0) target = $region25
    $region24: #{tpu_custom_call.1} parent=1 // pred_region
      %64 = dma.done [#allocation7], 2048
    $region25: #{tpu_custom_call.1} parent=1 // pred_fallthru
      _
    // Predicated region
    $region26: #{tpu_custom_call.1} parent=1 // pred_check
      _
    $region27: #{tpu_custom_call.1} parent=1 // pred_check_branch
      %66 = sbr.rel (0) target = $region29
    $region28: #{tpu_custom_call.1} parent=1 // pred_region
      %67 = dma.done [#allocation7], 256
    $region29: #{tpu_custom_call.1} parent=1 // pred_fallthru
      _
    // Predicated region
    $region30: #{tpu_custom_call.1} parent=1 // pred_check
      _
    $region31: #{tpu_custom_call.1} parent=1 // pred_check_branch
      %69 = sbr.rel (0) target = $region33
    $region32: #{tpu_custom_call.1} parent=1 // pred_region
      %70 = dma.done [#allocation10], 64
    $region33: #{tpu_custom_call.1} parent=1 // pred_fallthru
      _
    %p71 = scmp.eq.s32.totalorder 0, 0
    // Predicated region
    $region34: #{tpu_custom_call.1} parent=1 // pred_check
      %p72 = pneg %p71
    $region35: #{tpu_custom_call.1} parent=1 // pred_check_branch
      %74 = sbr.rel (%p72) target = $region37
    $region36: #{tpu_custom_call.1} parent=1 // pred_region
      %75 = vst [vmem:[#allocation2] sm:$0xff] 0.0
      %76 = vst [vmem:[#allocation2 + $0x8] sm:$0xff] 0.0
    $region37: #{tpu_custom_call.1} parent=1 // pred_fallthru
      _
    %v77 = vld [vmem:[#allocation2] sm:$0xff]
    %v78 = vld [vmem:[#allocation2 + $0x8] sm:$0xff]
    %v79 = vld [vmem:[#allocation3] sm:$0xff]
    %v80 = vld [vmem:[#allocation3 + $0x8] sm:$0xff]
    %v81 = vld [vmem:[#allocation6] sm:$0xff]
    %v82 = vld [vmem:[#allocation6 + $0x8] sm:$0xff]
    %v83 = vld [vmem:[#allocation6 + $0x10] sm:$0xff]
    %v84 = vld [vmem:[#allocation6 + $0x18] sm:$0xff]
    %v85 = vld [vmem:[#allocation6 + $0x20] sm:$0xff]
    %v86 = vld [vmem:[#allocation6 + $0x28] sm:$0xff]
    %v87 = vld [vmem:[#allocation6 + $0x30] sm:$0xff]
    %v88 = vld [vmem:[#allocation6 + $0x38] sm:$0xff]
    %v89 = vld [vmem:[#allocation6 + $0x40] sm:$0xff]
    %v90 = vld [vmem:[#allocation6 + $0x48] sm:$0xff]
    %v91 = vld [vmem:[#allocation6 + $0x50] sm:$0xff]
    %v92 = vld [vmem:[#allocation6 + $0x58] sm:$0xff]
    %v93 = vld [vmem:[#allocation6 + $0x60] sm:$0xff]
    %v94 = vld [vmem:[#allocation6 + $0x68] sm:$0xff]
    %v95 = vld [vmem:[#allocation6 + $0x70] sm:$0xff]
    %v96 = vld [vmem:[#allocation6 + $0x78] sm:$0xff]
    %97 = vmatprep.subr.mxu0 0.0
    %98 = vmatpush1.msra.mxu0 %v81
    %99 = vmatprep.subr.mxu0 0.0
    %100 = vmatpush1.msra.mxu0 %v82
    %101 = vmatprep.subr.mxu0 0.0
    %102 = vmatpush1.msra.mxu0 %v83
    %103 = vmatprep.subr.mxu0 0.0
    %104 = vmatpush1.msra.mxu0 %v84
    %105 = vmatprep.subr.mxu0 0.0
    %106 = vmatpush1.msra.mxu0 %v85
    %107 = vmatprep.subr.mxu0 0.0
    %108 = vmatpush1.msra.mxu0 %v86
    %109 = vmatprep.subr.mxu0 0.0
    %110 = vmatpush1.msra.mxu0 %v87
    %111 = vmatprep.subr.mxu0 0.0
    %112 = vmatpush1.msra.mxu0 %v88
    %113 = vmatprep.subr.mxu0 0.0
    %114 = vmatpush1.msra.mxu0 %v89
    %115 = vmatprep.subr.mxu0 0.0
    %116 = vmatpush1.msra.mxu0 %v90
    %117 = vmatprep.subr.mxu0 0.0
    %118 = vmatpush1.msra.mxu0 %v91
    %119 = vmatprep.subr.mxu0 0.0
    %120 = vmatpush1.msra.mxu0 %v92
    %121 = vmatprep.subr.mxu0 0.0
    %122 = vmatpush1.msra.mxu0 %v93
    %123 = vmatprep.subr.mxu0 0.0
    %124 = vmatpush1.msra.mxu0 %v94
    %125 = vmatprep.subr.mxu0 0.0
    %126 = vmatpush1.msra.mxu0 %v95
    %127 = vmatprep.subr.mxu0 0.0
    %128 = vmatpush1.msra.mxu0 %v96
    %129 = vmatprep.subr.mxu0 0.0
    %130 = vmatpush1.msra.mxu0 0.0
    %131 = vmatprep.subr.mxu0 0.0
    %132 = vmatpush1.msra.mxu0 0.0
    %133 = vmatprep.subr.mxu0 0.0
    %134 = vmatpush1.msra.mxu0 0.0
    %135 = vmatprep.subr.mxu0 0.0
    %136 = vmatpush1.msra.mxu0 0.0
    %137 = vmatprep.subr.mxu0 0.0
    %138 = vmatpush1.msra.mxu0 0.0
    %139 = vmatprep.subr.mxu0 0.0
    %140 = vmatpush1.msra.mxu0 0.0
    %141 = vmatprep.subr.mxu0 0.0
    %142 = vmatpush1.msra.mxu0 0.0
    %143 = vmatprep.subr.mxu0 0.0
    %144 = vmatpush1.msra.mxu0 0.0
    %145 = vmatprep.subr.mxu0 0.0
    %146 = vmatpush1.msra.mxu0 0.0
    %147 = vmatprep.subr.mxu0 0.0
    %148 = vmatpush1.msra.mxu0 0.0
    %149 = vmatprep.subr.mxu0 0.0
    %150 = vmatpush1.msra.mxu0 0.0
    %151 = vmatprep.subr.mxu0 0.0
    %152 = vmatpush1.msra.mxu0 0.0
    %153 = vmatprep.subr.mxu0 0.0
    %154 = vmatpush1.msra.mxu0 0.0
    %155 = vmatprep.subr.mxu0 0.0
    %156 = vmatpush1.msra.mxu0 0.0
    %157 = vmatprep.subr.mxu0 0.0
    %158 = vmatpush1.msra.mxu0 0.0
    %159 = vmatprep.subr.mxu0 0.0
    %160 = vmatpush1.msra.mxu0 0.0
    %161 = vmatprep.mubr.f32.mxu0 0.0
    %162 = vmatmul.mubr.f32.gmra.mrb[0].mxu0 %v79
    %v163 = vpop.f32.mrb[0].mxu0
    %v164 = vadd.f32 0.0, %v163
    %v165 = vpop.f32.mrb[0].mxu0
    %166 = vmatprep.mubr.f32.mxu0 0.0
    %167 = vmatmul.mubr.f32.gmra.mrb[0].mxu0 %v80
    %v168 = vpop.f32.mrb[0].mxu0
    %v169 = vadd.f32 0.0, %v168
    %v170 = vpop.f32.mrb[0].mxu0
    %171 = vdwg.mxu0
    %v172 = vadd.f32 %v77, %v164
    %v173 = vadd.f32 %v78, %v169
    %174 = vst [vmem:[#allocation2] sm:$0xff] %v172
    %175 = vst [vmem:[#allocation2 + $0x8] sm:$0xff] %v173
    // Predicated region
    $region38: #{tpu_custom_call.1} parent=1 // pred_check
      %p176 = pneg %p71
    $region39: #{tpu_custom_call.1} parent=1 // pred_check_branch
      %178 = sbr.rel (%p176) target = $region41
    $region40: #{tpu_custom_call.1} parent=1 // pred_region
      %v179 = vld [vmem:[#allocation9] sm:$0x1]
      %v180 = vld [vmem:[#allocation9 + $0x1] sm:$0x1]
      %v181 = vld [vmem:[#allocation9 + $0x2] sm:$0x1]
      %v182 = vld [vmem:[#allocation2] sm:$0xff]
      %v183 = vld [vmem:[#allocation2 + $0x8] sm:$0xff]
      %v184 = vlaneseq
      %v185 = vshrl.u32 %v184, 7
      %v186 = vsub.s32 0, %v185
      %v187 = vrot.slane %v179, %v186
      %v188 = vadd.f32 %v182, %v187
      %v189 = vadd.f32 %v183, %v187
      %v190 = vld [vmem:[#allocation8] sm:$0xff]
      %v191 = vld [vmem:[#allocation8 + $0x8] sm:$0xff]
      %v192 = vadd.f32 %v188, %v190
      %v193 = vadd.f32 %v189, %v191
      %194 = vadd.xlane.f32.xlu0 %v192
      %v195 = vpop.xlane.xlu0 %194
      %196 = vadd.xlane.f32.xlu0 %v193
      %v197 = vpop.xlane.xlu0 %196
      %v198 = vmul.f32 %v192, %v192
      %v199 = vmul.f32 %v193, %v193
      %200 = vadd.xlane.f32.xlu0 %v198
      %v201 = vpop.xlane.xlu0 %200
      %202 = vadd.xlane.f32.xlu0 %v199
      %v203 = vpop.xlane.xlu0 %202
      %v204 = vmul.f32 %v195, 0.03125
      %v205 = vmul.f32 %v197, 0.03125
      %v206 = vmul.f32 %v201, 0.03125
      %v207 = vmul.f32 %v203, 0.03125
      %v208 = vmul.f32 %v204, %v204
      %v209 = vmul.f32 %v205, %v205
      %v210 = vsub.f32 %v206, %v208
      %v211 = vsub.f32 %v207, %v209
      %v212 = vmax.f32 %v210, 0.0
      %v213 = vmax.f32 %v211, 0.0
      %v214 = vadd.f32 %v212, 1e-05
      %v215 = vadd.f32 %v213, 1e-05
      %v216 = vrsqrt.pop %v214
      %v217 = vrsqrt.pop %v215
      %v218 = vsub.f32 %v192, %v204
      %v219 = vsub.f32 %v193, %v205
      %v220 = vmul.f32 %v218, %v216
      %v221 = vmul.f32 %v219, %v217
      %v222 = vlaneseq
      %v223 = vshrl.u32 %v222, 7
      %v224 = vsub.s32 0, %v223
      %v225 = vrot.slane %v180, %v224
      %v226 = vmul.f32 %v220, %v225
      %v227 = vmul.f32 %v221, %v225
      %v228 = vlaneseq
      %v229 = vshrl.u32 %v228, 7
      %v230 = vsub.s32 0, %v229
      %v231 = vrot.slane %v181, %v230
      %v232 = vadd.f32 %v226, %v231
      %v233 = vadd.f32 %v227, %v231
      %234 = vst [vmem:[#allocation11] sm:$0xff] %v232
      %235 = vst [vmem:[#allocation11 + $0x8] sm:$0xff] %v233
    $region41: #{tpu_custom_call.1} parent=1 // pred_fallthru
      _
    // Predicated region
    $region42: #{tpu_custom_call.1} parent=1 // pred_check
      _
    $region43: #{tpu_custom_call.1} parent=1 // pred_check_branch
      %237 = sbr.rel (0) target = $region45
    $region44: #{tpu_custom_call.1} parent=1 // pred_region
      %s239 = ssub.s32 256, 256
      %240 = vsyncadd [#allocation5], %s239
      %s241 = sshll.u32 [#allocation11], 4
      %s242 = int_to_ptr.vmem [resolvable:$true] %s241
      %247 = dma.vmem_to_hbm [thread:$0]  %s242, 256, %s4, [#allocation5], 128, 128, 8
    $region45: #{tpu_custom_call.1} parent=1 // pred_fallthru
      _
    // Predicated region
    $region46: #{tpu_custom_call.1} parent=1 // pred_check
      _
    $region47: #{tpu_custom_call.1} parent=1 // pred_check_branch
      %249 = sbr.rel (0) target = $region49
    $region48: #{tpu_custom_call.1} parent=1 // pred_region
      %250 = dma.done [#allocation5], 256
    $region49: #{tpu_custom_call.1} parent=1 // pred_fallthru
      _
    %251 = vsyncpa [#allocation4], 1
    %252 = vsyncpa [#allocation7], 1
    %253 = vsyncpa [#allocation10], 1
    %254 = vsyncpa [#allocation5], 1

</llo_original>
